<compile_context>
chip_gen: v7x
topology: tpu7x:2x2x1
jax: 0.10.0
libtpu: 0.0.40
codegen_flags: <defaults>
</compile_context>

<pallas_src>
import functools
import inspect

import jax
import jax.numpy as jnp
from jax.experimental import pallas as pl
from jax.experimental.pallas import tpu as pltpu


# ----------------------------------------------------------------------------
# Small helpers
# ----------------------------------------------------------------------------
def _round_up(v, m):
    return (v + m - 1) // m * m


def _cdiv(a, b):
    return -(-a // b)


def _mish(x):
    """Mish(x) = x * tanh(softplus(x)) with one EUP exp + one approx reciprocal.

    tanh(log1p(exp(x))) == (s - 1) / (s + 1) with s = (1 + exp(x))**2.  The exp
    is clamped so s stays finite in f32; for x >= 20 the ratio is 1.0 to f32
    precision, so Mish(x) ~= x there (to approx-reciprocal accuracy).
    Mish(0) == 0 exactly, so zero-padded channels stay zero.
    """
    t = jnp.exp(jnp.minimum(x, 20.0))
    s = (1.0 + t) * (1.0 + t)
    return x * (s - 1.0) * pl.reciprocal(s + 1.0, approx=True)


# ----------------------------------------------------------------------------
# Kernel
# ----------------------------------------------------------------------------
def reduce_net_kernel(x_ref, w1_ref, b1_ref, w2_ref, b2_ref, o_ref, acc_ref,
                      *, n_total, needs_mask):
    # x_ref : (B, tn, C) bf16 tile (grid axis 0 = parallel N-chunk, axis 1 = step)
    # w1_ref: (C, Hp) bf16, b1_ref: (1, Hp) f32   -- conv1 (k=1), transposed
    # w2_ref: (Hp, Hp) bf16, b2_ref: (1, Hp) f32  -- conv2 (k=1), transposed
    # o_ref : (1, B, Hp) f32 per-chunk partial sum of h2 over this chunk's N
    # acc_ref: (B, Hp) f32 scratch accumulator (re-initialised per chunk)
    s = pl.program_id(1)
    n_inner = pl.num_programs(1)

    @pl.when(s == 0)
    def _():
        acc_ref[...] = jnp.zeros_like(acc_ref)

    B, tn, C = x_ref.shape
    Hp = w1_ref.shape[1]

    # All B*tn positions of this tile in ONE MXU matmul per layer (tn % 8 == 0,
    # so the (B, tn, C) <-> (B*tn, C) reshapes are layout no-ops).
    x_flat = x_ref[...].reshape(B * tn, C)                               # bf16
    h1 = _mish(jnp.dot(x_flat, w1_ref[...],
                       preferred_element_type=jnp.float32) + b1_ref[...])
    h2 = _mish(jnp.dot(h1.astype(w2_ref.dtype), w2_ref[...],
                       preferred_element_type=jnp.float32) + b2_ref[...])
    h2 = h2.reshape(B, tn, Hp)                                           # f32

    if needs_mask:
        # Zero the rows that fall beyond the real sequence length (the wrapper
        # zero-pads x to P*S*tn, but the biases would otherwise leak into the
        # pooling sum).
        base = (pl.program_id(0) * n_inner + s) * tn
        pos = base + jax.lax.broadcasted_iota(jnp.int32, (1, tn, 1), 1)
        h2 = jnp.where(pos < n_total, h2, 0.0)

    # Running sum for AdaptiveAvgPool1d(1) (divide by N happens in the wrapper).
    acc_ref[...] += jnp.sum(h2, axis=1)

    @pl.when(s == n_inner - 1)
    def _():
        o_ref[...] = acc_ref[...].reshape(1, B, Hp)      # one lane-dense store


# ----------------------------------------------------------------------------
# Wrapper
# ----------------------------------------------------------------------------
def _plan_grid(B, N, *, target_tn=1024, x_budget_bytes=16 << 20):
    """Pick (tn, P, S): tn multiple of 8 near target (VMEM-capped), P parallel
    N-chunks (feeds v7x's two TensorCores), S sequential steps per chunk."""
    per_pos_bytes = max(B, 1) * 128 * 2            # bf16, C lane-padded to 128
    cap = max(8, (x_budget_bytes // (2 * per_pos_bytes)) // 8 * 8)
    tn = max(8, min(_round_up(N, 8), _round_up(target_tn, 8), cap))
    tiles = _cdiv(N, tn)
    p = 2 if tiles >= 2 else 1
    s = _cdiv(tiles, p)
    return tn, p, s


def _vmem_limit_bytes(B, tn, C, Hp):
    x_tile = B * _round_up(tn, 16) * 128 * 2                    # bf16 lane-padded
    w_bytes = (_round_up(C, 16) * Hp + Hp * Hp) * 2             # bf16 weights
    b_bytes = 2 * 16 * Hp * 4                                   # f32 biases
    acc = _round_up(B, 8) * Hp * 4
    out = _round_up(B, 8) * Hp * 4
    # Assume worst-case double buffering for everything, then add headroom;
    # clamp comfortably under v7x's 64 MiB physical VMEM.
    need = 2 * x_tile + 2 * (w_bytes + b_bytes) + acc + 2 * out
    return int(min(max(need + (8 << 20), 32 << 20), 56 << 20))


def _maybe_single_buffer_kwargs():
    """pipeline_mode=pl.Buffered(1) for constant blocks when supported."""
    try:
        if hasattr(pl, "Buffered") and \
           "pipeline_mode" in inspect.signature(pl.BlockSpec).parameters:
            return {"pipeline_mode": pl.Buffered(1)}
    except (TypeError, ValueError):
        pass
    return {}


def reduce_net_forward(x, params, *, target_tn=1024):
    B, N, C = x.shape
    H = params["w1"].shape[1]
    Hp = _round_up(H, 128)                 # lane-dense hidden dim inside kernel

    tn, P, S = _plan_grid(B, N, target_tn=target_tn)
    n_pad = P * S * tn
    needs_mask = n_pad > N

    # bf16 input (halves DMA bytes / x VMEM); zero-pad N so every block is a
    # well-defined in-bounds read.
    xb = x.astype(jnp.bfloat16)
    if n_pad != N:
        xb = jnp.pad(xb, ((0, 0), (0, n_pad - N), (0, 0)))

    def pad_h(a, axes):
        pads = [(0, 0)] * a.ndim
        for ax in axes:
            pads[ax] = (0, Hp - a.shape[ax])
        return jnp.pad(a, pads)

    w1 = pad_h(params["w1"], [1]).astype(jnp.bfloat16)     # (C, Hp)
    b1 = pad_h(params["b1"], [1])                          # (1, Hp) f32
    w2 = pad_h(params["w2"], [0, 1]).astype(jnp.bfloat16)  # (Hp, Hp)
    b2 = pad_h(params["b2"], [1])                          # (1, Hp) f32

    const_kwargs = _maybe_single_buffer_kwargs()

    def const_spec(shape):
        # Weight/bias block resident in VMEM across all grid steps.
        return pl.BlockSpec(shape, lambda *_: (0,) * len(shape), **const_kwargs)

    grid_spec = pltpu.PrefetchScalarGridSpec(
        num_scalar_prefetch=0,
        grid=(P, S),
        in_specs=[
            # x: tiled over N; chunk p owns blocks [p*S, (p+1)*S).
            pl.BlockSpec((B, tn, C), lambda p, s: (0, p * S + s, 0)),
            const_spec((w1.shape[0], Hp)), const_spec((1, Hp)),   # conv1
            const_spec((Hp, Hp)), const_spec((1, Hp)),            # conv2
        ],
        out_specs=pl.BlockSpec((1, B, Hp), lambda p, s: (p, 0, 0)),
        scratch_shapes=[pltpu.VMEM((B, Hp), jnp.float32)],
    )

    partials = pl.pallas_call(
        functools.partial(reduce_net_kernel, n_total=N, needs_mask=needs_mask),
        out_shape=jax.ShapeDtypeStruct((P, B, Hp), jnp.float32),
        grid_spec=grid_spec,
        compiler_params=pltpu.CompilerParams(
            # Outer N-chunk axis is independent (megacore-parallel on v7x);
            # inner axis carries the pooling accumulator -> sequential.
            dimension_semantics=("parallel", "arbitrary"),
            vmem_limit_bytes=_vmem_limit_bytes(B, tn, C, Hp),
        ),
    )(xb, w1, b1, w2, b2)

    # Combine chunk partial sums, finish AdaptiveAvgPool1d(1), then the tiny
    # O(B*H^2) fc once in XLA (keeps the HxH fc weight out of resident VMEM).
    pooled = (jnp.sum(partials, axis=0) * (1.0 / N))[:, :H]     # (B, H) f32
    return pooled @ params["wf"] + params["bf"][0]              # (B, H)


# ----------------------------------------------------------------------------
# Params / reference / test
# ----------------------------------------------------------------------------
def init_params(key, state_dim, hidden_dim):
    """Deterministic init mimicking PyTorch default (uniform +/- 1/sqrt(fan_in))."""
    k1, k2, k3, k4, k5, k6 = jax.random.split(key, 6)

    def u(k, shape, fan_in):
        bound = 1.0 / jnp.sqrt(jnp.float32(fan_in))
        return jax.random.uniform(k, shape, jnp.float32, -bound, bound)

    return {
        # conv1: PyTorch weight (H, C, 1) -> stored transposed (C, H)
        "w1": u(k1, (state_dim, hidden_dim), state_dim),
        "b1": u(k2, (1, hidden_dim), state_dim),
        # conv2: (H, H, 1) -> (H, H) transposed
        "w2": u(k3, (hidden_dim, hidden_dim), hidden_dim),
        "b2": u(k4, (1, hidden_dim), hidden_dim),
        # fc: Linear(H, H) weight -> stored transposed (H, H)
        "wf": u(k5, (hidden_dim, hidden_dim), hidden_dim),
        "bf": u(k6, (1, hidden_dim), hidden_dim),
    }


def _mish_exact(x):
    return x * jnp.tanh(jax.nn.softplus(x))


def reference_forward(x, p):
    """Pure-JAX f32 reference matching the PyTorch module (exact Mish)."""
    h1 = _mish_exact(jnp.einsum("bnc,ch->bnh", x, p["w1"]) + p["b1"])
    h2 = _mish_exact(jnp.einsum("bnh,hk->bnk", h1, p["w2"]) + p["b2"])
    pooled = jnp.mean(h2, axis=1)          # (B, H) == AdaptiveAvgPool1d(1)
    return pooled @ p["wf"] + p["bf"][0]   # (B, H)


if __name__ == "__main__":
    B, N, state_dim, hidden_dim = 2, 8, 4, 32

    key = jax.random.PRNGKey(0)
    kx, kp = jax.random.split(key)
    x = jax.random.normal(kx, (B, N, state_dim), dtype=jnp.float32)
    params = init_params(kp, state_dim, hidden_dim)

    out = jax.block_until_ready(reduce_net_forward(x, params))
    ref = reference_forward(x, params)

    assert out.shape == (B, hidden_dim), out.shape
    # Tolerance covers the intentional bf16 MXU operands and the approximate
    # EUP reciprocal inside Mish (reference is exact f32).
    err = jnp.max(jnp.abs(out - ref))
    assert jnp.allclose(out, ref, rtol=2e-2, atol=2e-2), f"max abs err {err}"
    print("KERNEL_OK")
</pallas_src>

<mosaic_0001>
module attributes {stable_mosaic.version = 11 : i64} {
  func.func @reduce_net_kernel(%arg0: i32, %arg1: i32, %arg2: memref<2x8x4xbf16, #tpu.memory_space<vmem>>, %arg3: memref<4x128xbf16, #tpu.memory_space<vmem>>, %arg4: memref<1x128xf32, #tpu.memory_space<vmem>>, %arg5: memref<128x128xbf16, #tpu.memory_space<vmem>>, %arg6: memref<1x128xf32, #tpu.memory_space<vmem>>, %arg7: memref<1x2x128xf32, #tpu.memory_space<vmem>>, %arg8: memref<2x128xf32, #tpu.memory_space<vmem>>) attributes {dimension_semantics = [#tpu.dimension_semantics<parallel>, #tpu.dimension_semantics<arbitrary>], iteration_bounds = array<i64: 1, 1>, scalar_prefetch = 0 : i64, scratch_operands = 1 : i64, tpu.core_type = #tpu.core_type<tc>, window_params = [{transform_indices = @transform_0, window_bounds = array<i64: 2, 8, 4>}, {pipeline_mode = #tpu.pipeline_mode<synchronous>, transform_indices = @transform_1, window_bounds = array<i64: 4, 128>}, {pipeline_mode = #tpu.pipeline_mode<synchronous>, transform_indices = @transform_2, window_bounds = array<i64: 1, 128>}, {pipeline_mode = #tpu.pipeline_mode<synchronous>, transform_indices = @transform_3, window_bounds = array<i64: 128, 128>}, {pipeline_mode = #tpu.pipeline_mode<synchronous>, transform_indices = @transform_4, window_bounds = array<i64: 1, 128>}, {transform_indices = @transform_5, window_bounds = array<i64: 1, 2, 128>}]} {
    %c0_i32 = arith.constant 0 : i32
    %0 = arith.cmpi eq, %arg1, %c0_i32 : i32
    %1 = arith.extui %0 : i1 to i32
    %c0_i32_0 = arith.constant 0 : i32
    %2 = arith.cmpi ne, %1, %c0_i32_0 : i32
    scf.if %2 {
      %cst_29 = arith.constant 0.000000e+00 : f32
      %54 = vector.broadcast %cst_29 : f32 to vector<2x128xf32>
      %c0_30 = arith.constant 0 : index
      %c0_31 = arith.constant 0 : index
      %55 = vector.load %arg8[%c0_30, %c0_31] : memref<2x128xf32, #tpu.memory_space<vmem>>, vector<2x128xf32>
      tpu.vector_store %arg8[%c0_30, %c0_31], %54 {strides = array<i32>} : memref<2x128xf32, #tpu.memory_space<vmem>>, vector<2x128xf32>,
    } else {
    }
    %c0 = arith.constant 0 : index
    %c0_1 = arith.constant 0 : index
    %c0_2 = arith.constant 0 : index
    %3 = vector.load %arg2[%c0, %c0_1, %c0_2] : memref<2x8x4xbf16, #tpu.memory_space<vmem>>, vector<2x8x4xbf16>
    %4 = vector.shape_cast %3 : vector<2x8x4xbf16> to vector<16x4xbf16>
    %c0_3 = arith.constant 0 : index
    %c0_4 = arith.constant 0 : index
    %5 = vector.load %arg3[%c0_3, %c0_4] : memref<4x128xbf16, #tpu.memory_space<vmem>>, vector<4x128xbf16>
    %cst = arith.constant dense<0.000000e+00> : vector<16x128xf32>
    %6 = tpu.matmul %4, %5, %cst {dimension_numbers = #tpu.dot_dimension_numbers<[1], [0], [0], [1], [0, 0, 1, 1], [], []>} : vector<16x4xbf16>, vector<4x128xbf16>, vector<16x128xf32> -> vector<16x128xf32>
    %c0_5 = arith.constant 0 : index
    %c0_6 = arith.constant 0 : index
    %7 = vector.load %arg4[%c0_5, %c0_6] : memref<1x128xf32, #tpu.memory_space<vmem>>, vector<1x128xf32>
    %8 = vector.broadcast %7 : vector<1x128xf32> to vector<16x128xf32>
    %9 = arith.addf %6, %8 : vector<16x128xf32>
    %cst_7 = arith.constant 2.000000e+01 : f32
    %10 = vector.broadcast %cst_7 : f32 to vector<16x128xf32>
    %11 = arith.minimumf %9, %10 : vector<16x128xf32>
    %12 = math.exp %11 : vector<16x128xf32>
    %cst_8 = arith.constant 1.000000e+00 : f32
    %13 = vector.broadcast %cst_8 : f32 to vector<16x128xf32>
    %14 = arith.addf %13, %12 : vector<16x128xf32>
    %cst_9 = arith.constant 1.000000e+00 : f32
    %15 = vector.broadcast %cst_9 : f32 to vector<16x128xf32>
    %16 = arith.addf %15, %12 : vector<16x128xf32>
    %17 = arith.mulf %14, %16 : vector<16x128xf32>
    %cst_10 = arith.constant 1.000000e+00 : f32
    %18 = vector.broadcast %cst_10 : f32 to vector<16x128xf32>
    %19 = arith.subf %17, %18 : vector<16x128xf32>
    %20 = arith.mulf %9, %19 : vector<16x128xf32>
    %cst_11 = arith.constant 1.000000e+00 : f32
    %21 = vector.broadcast %cst_11 : f32 to vector<16x128xf32>
    %22 = arith.addf %17, %21 : vector<16x128xf32>
    %23 = tpu.reciprocal %22 {approx = true} : vector<16x128xf32> -> vector<16x128xf32>
    %24 = arith.mulf %20, %23 : vector<16x128xf32>
    %25 = arith.truncf %24 : vector<16x128xf32> to vector<16x128xbf16>
    %c0_12 = arith.constant 0 : index
    %c0_13 = arith.constant 0 : index
    %26 = vector.load %arg5[%c0_12, %c0_13] : memref<128x128xbf16, #tpu.memory_space<vmem>>, vector<128x128xbf16>
    %cst_14 = arith.constant dense<0.000000e+00> : vector<16x128xf32>
    %27 = tpu.matmul %25, %26, %cst_14 {dimension_numbers = #tpu.dot_dimension_numbers<[1], [0], [0], [1], [0, 0, 1, 1], [], []>} : vector<16x128xbf16>, vector<128x128xbf16>, vector<16x128xf32> -> vector<16x128xf32>
    %c0_15 = arith.constant 0 : index
    %c0_16 = arith.constant 0 : index
    %28 = vector.load %arg6[%c0_15, %c0_16] : memref<1x128xf32, #tpu.memory_space<vmem>>, vector<1x128xf32>
    %29 = vector.broadcast %28 : vector<1x128xf32> to vector<16x128xf32>
    %30 = arith.addf %27, %29 : vector<16x128xf32>
    %cst_17 = arith.constant 2.000000e+01 : f32
    %31 = vector.broadcast %cst_17 : f32 to vector<16x128xf32>
    %32 = arith.minimumf %30, %31 : vector<16x128xf32>
    %33 = math.exp %32 : vector<16x128xf32>
    %cst_18 = arith.constant 1.000000e+00 : f32
    %34 = vector.broadcast %cst_18 : f32 to vector<16x128xf32>
    %35 = arith.addf %34, %33 : vector<16x128xf32>
    %cst_19 = arith.constant 1.000000e+00 : f32
    %36 = vector.broadcast %cst_19 : f32 to vector<16x128xf32>
    %37 = arith.addf %36, %33 : vector<16x128xf32>
    %38 = arith.mulf %35, %37 : vector<16x128xf32>
    %cst_20 = arith.constant 1.000000e+00 : f32
    %39 = vector.broadcast %cst_20 : f32 to vector<16x128xf32>
    %40 = arith.subf %38, %39 : vector<16x128xf32>
    %41 = arith.mulf %30, %40 : vector<16x128xf32>
    %cst_21 = arith.constant 1.000000e+00 : f32
    %42 = vector.broadcast %cst_21 : f32 to vector<16x128xf32>
    %43 = arith.addf %38, %42 : vector<16x128xf32>
    %44 = tpu.reciprocal %43 {approx = true} : vector<16x128xf32> -> vector<16x128xf32>
    %45 = arith.mulf %41, %44 : vector<16x128xf32>
    %46 = vector.shape_cast %45 : vector<16x128xf32> to vector<2x8x128xf32>
    %c0_22 = arith.constant 0 : index
    %c0_23 = arith.constant 0 : index
    %47 = vector.load %arg8[%c0_22, %c0_23] : memref<2x128xf32, #tpu.memory_space<vmem>>, vector<2x128xf32>
    %cst_24 = arith.constant dense<0.000000e+00> : vector<2x128xf32>
    %48 = vector.multi_reduction <add>, %46, %cst_24 [1] : vector<2x8x128xf32> to vector<2x128xf32>
    %49 = arith.addf %47, %48 : vector<2x128xf32>
    %c0_25 = arith.constant 0 : index
    %c0_26 = arith.constant 0 : index
    %50 = vector.load %arg8[%c0_25, %c0_26] : memref<2x128xf32, #tpu.memory_space<vmem>>, vector<2x128xf32>
    tpu.vector_store %arg8[%c0_25, %c0_26], %49 {strides = array<i32>} : memref<2x128xf32, #tpu.memory_space<vmem>>, vector<2x128xf32>,
    %c0_i32_27 = arith.constant 0 : i32
    %51 = arith.cmpi eq, %arg1, %c0_i32_27 : i32
    %52 = arith.extui %51 : i1 to i32
    %c0_i32_28 = arith.constant 0 : i32
    %53 = arith.cmpi ne, %52, %c0_i32_28 : i32
    scf.if %53 {
      %c0_29 = arith.constant 0 : index
      %c0_30 = arith.constant 0 : index
      %54 = vector.load %arg8[%c0_29, %c0_30] : memref<2x128xf32, #tpu.memory_space<vmem>>, vector<2x128xf32>
      %55 = vector.shape_cast %54 : vector<2x128xf32> to vector<1x2x128xf32>
      %c0_31 = arith.constant 0 : index
      %c0_32 = arith.constant 0 : index
      %c0_33 = arith.constant 0 : index
      %56 = vector.load %arg7[%c0_31, %c0_32, %c0_33] : memref<1x2x128xf32, #tpu.memory_space<vmem>>, vector<1x2x128xf32>
      tpu.vector_store %arg7[%c0_31, %c0_32, %c0_33], %55 {strides = array<i32>} : memref<1x2x128xf32, #tpu.memory_space<vmem>>, vector<1x2x128xf32>,
    } else {
    }
    return
  }
  func.func @transform_0(%arg0: i32, %arg1: i32) -> (i32, i32, i32) {
    %c1_i32 = arith.constant 1 : i32
    %0 = arith.muli %arg0, %c1_i32 : i32
    %1 = arith.addi %0, %arg1 : i32
    %c0_i32 = arith.constant 0 : i32
    %c0_i32_0 = arith.constant 0 : i32
    %c0_i32_1 = arith.constant 0 : i32
    return %c0_i32, %1, %c0_i32_0 : i32, i32, i32
  }
  func.func @transform_1(%arg0: i32, %arg1: i32) -> (i32, i32) {
    %c0_i32 = arith.constant 0 : i32
    %c0_i32_0 = arith.constant 0 : i32
    %c0_i32_1 = arith.constant 0 : i32
    return %c0_i32, %c0_i32_0 : i32, i32
  }
  func.func @transform_2(%arg0: i32, %arg1: i32) -> (i32, i32) {
    %c0_i32 = arith.constant 0 : i32
    %c0_i32_0 = arith.constant 0 : i32
    %c0_i32_1 = arith.constant 0 : i32
    return %c0_i32, %c0_i32_0 : i32, i32
  }
  func.func @transform_3(%arg0: i32, %arg1: i32) -> (i32, i32) {
    %c0_i32 = arith.constant 0 : i32
    %c0_i32_0 = arith.constant 0 : i32
    %c0_i32_1 = arith.constant 0 : i32
    return %c0_i32, %c0_i32_0 : i32, i32
  }
  func.func @transform_4(%arg0: i32, %arg1: i32) -> (i32, i32) {
    %c0_i32 = arith.constant 0 : i32
    %c0_i32_0 = arith.constant 0 : i32
    %c0_i32_1 = arith.constant 0 : i32
    return %c0_i32, %c0_i32_0 : i32, i32
  }
  func.func @transform_5(%arg0: i32, %arg1: i32) -> (i32, i32, i32) {
    %c0_i32 = arith.constant 0 : i32
    %c0_i32_0 = arith.constant 0 : i32
    %c0_i32_1 = arith.constant 0 : i32
    return %arg0, %c0_i32, %c0_i32_0 : i32, i32, i32
  }
}

</mosaic_0001>

<llo_original>
// kernel: tpu_custom_call.1
$region0: #{tpu_custom_call.1}
  #allocation0 [shape = 'u32[]', space=smem, size = 0x4, offset = 0x4, fixed_abs, tag = 'smem constant byte address 0x4 - core index']
  #allocation1 [shape = 'u32[144,128]{1,0:T(1,128)}', space=vmem, size = 0x12000, scoped, tag = 'internal scratch']
  #allocation2 [shape = 'f32[2,128]{1,0:T(2,128)}', space=vmem, size = 0x400, scoped, tag = 'scratch operand']
  %s0 = inlined_call_operand.vmem [shape: bf16[2,8,4], index: 0, kind: input, shape index: {}]
  %s1 = inlined_call_operand.vmem [shape: bf16[4,128], index: 1, kind: input, shape index: {}]
  %s2 = inlined_call_operand.vmem [shape: f32[1,128], index: 2, kind: input, shape index: {}]
  %s3 = inlined_call_operand.hbm [shape: bf16[128,128], index: 3, kind: input, shape index: {}]
  %s4 = inlined_call_operand.vmem [shape: f32[1,128], index: 4, kind: input, shape index: {}]
  %s5 = inlined_call_operand.hbm [shape: f32[1,2,128], index: 5, kind: output, shape index: {}]
  %s6 = sld [smem:[#allocation0]]
  $region42: #{tpu_custom_call.1} parent=0
    _
  %s8 = ssub.s32 1, %s6
  %s9 = scalar_select 0, %s8, %s6
  $region1: #{tpu_custom_call.1} parent=0
    #allocation3 [shape = 'u8[32768]{0}', space=vmem, size = 0x8000, scoped, tag = 'input window, operand 3, single buffered']
    #allocation4 [shape = 's32[1]{0}', space=sflag, size = 0x4, scoped, tag = 'scoped memory for tpu_custom_call.1']
    #allocation5 [shape = 's32[1]{0}', space=sflag, size = 0x4, scoped, tag = 'scoped memory for tpu_custom_call.1']
    #allocation6 [shape = 'u8[1024]{0}', space=vmem, size = 0x400, scoped, tag = 'output window, operand 0, single buffered']
    %10 = vsyncpa [#allocation4], 0
    %11 = vsyncpa [#allocation5], 0
    // Predicated region
    $region2: #{tpu_custom_call.1} parent=1 // pred_check
      _
    $region3: #{tpu_custom_call.1} parent=1 // pred_check_branch
      %13 = sbr.rel (0) target = $region5
    $region4: #{tpu_custom_call.1} parent=1 // pred_region
      %s14 = sadd.s32 0, 0
      %p15 = scmp.lt.s32.totalorder %s14, 0
      %s16 = scalar_select %p15, %s14, 0
      %s17 = smul.addr %s16, 4
      %s18 = scalar_lea.vmem %s0, %s17
      %s19 = sadd.s32 0, 0
    $region5: #{tpu_custom_call.1} parent=1 // pred_fallthru
      _
    // Predicated region
    $region6: #{tpu_custom_call.1} parent=1 // pred_check
      _
    $region7: #{tpu_custom_call.1} parent=1 // pred_check_branch
      %21 = sbr.rel (0) target = $region9
    $region8: #{tpu_custom_call.1} parent=1 // pred_region
      _
    $region9: #{tpu_custom_call.1} parent=1 // pred_fallthru
      _
    // Predicated region
    $region10: #{tpu_custom_call.1} parent=1 // pred_check
      _
    $region11: #{tpu_custom_call.1} parent=1 // pred_check_branch
      %23 = sbr.rel (0) target = $region13
    $region12: #{tpu_custom_call.1} parent=1 // pred_region
      _
    $region13: #{tpu_custom_call.1} parent=1 // pred_fallthru
      _
    // Predicated region
    $region14: #{tpu_custom_call.1} parent=1 // pred_check
      _
    $region15: #{tpu_custom_call.1} parent=1 // pred_check_branch
      %25 = sbr.rel (0) target = $region17
    $region16: #{tpu_custom_call.1} parent=1 // pred_region
      %s27 = ssub.s32 1024, 1024
      %28 = vsyncadd [#allocation4], %s27
      %s29 = sshll.u32 [#allocation3], 4
      %s30 = int_to_ptr.vmem [resolvable:$true] %s29
      %35 = dma.hbm_to_vmem [thread:$0]  %s3, 1024, %s30, [#allocation4], 64, 64, 4
    $region17: #{tpu_custom_call.1} parent=1 // pred_fallthru
      _
    // Predicated region
    $region18: #{tpu_custom_call.1} parent=1 // pred_check
      _
    $region19: #{tpu_custom_call.1} parent=1 // pred_check_branch
      %37 = sbr.rel (0) target = $region21
    $region20: #{tpu_custom_call.1} parent=1 // pred_region
      _
    $region21: #{tpu_custom_call.1} parent=1 // pred_fallthru
      _
    // Predicated region
    $region22: #{tpu_custom_call.1} parent=1 // pred_check
      _
    $region23: #{tpu_custom_call.1} parent=1 // pred_check_branch
      %39 = sbr.rel (0) target = $region25
    $region24: #{tpu_custom_call.1} parent=1 // pred_region
      %40 = dma.done [#allocation4], 1024
    $region25: #{tpu_custom_call.1} parent=1 // pred_fallthru
      _
    %s41 = sadd.s32 0, 0
    %p42 = scmp.lt.s32.totalorder %s41, 0
    %s43 = scalar_select %p42, %s41, 0
    %s44 = smul.addr %s43, 4
    %s45 = scalar_lea.vmem %s0, %s44
    %s46 = sadd.s32 0, 0
    %p47 = scmp.lt.s32.totalorder %s46, 0
    %s48 = scalar_select %p47, %s46, 0
    %s49 = smul.addr %s48, 4
    %s50 = scalar_lea.vmem %s0, %s49
    %s51 = sadd.s32 0, 0
    %p53 = scmp.eq.s32.totalorder 0, 0
    // Predicated region
    $region26: #{tpu_custom_call.1} parent=1 // pred_check
      %p54 = pneg %p53
    $region27: #{tpu_custom_call.1} parent=1 // pred_check_branch
      %56 = sbr.rel (%p54) target = $region29
    $region28: #{tpu_custom_call.1} parent=1 // pred_region
      %57 = vst [vmem:[#allocation2] sm:$0x3] 0.0
    $region29: #{tpu_custom_call.1} parent=1 // pred_fallthru
      _
    %v58 = vld [vmem:[%s50] sm:$0xf]
    %v59 = vld [vmem:[%s50 + $0x4] sm:$0xf]
    %v60 = vld [vmem:[%s1] sm:$0x3]
    %v61 = vld [vmem:[%s2] sm:$0x1]
    %v63 = vlaneseq
    %v64 = vshrl.u32 %v63, 7
    %v65 = vsub.s32 0, %v64
    %v66 = vrot.slane %v61, %v65
    %v70 = vunpack.c.l.b16 %v58
    %v71 = vunpack.c.l.b16 %v59
    %v72 = vpack.c.b16 %v71, %v70
    %vm73 = vcmask 31744
    %v75 = vsel %vm73, %v72, 0
    %vm77 = vcmask 1041408
    %v79 = vsel %vm77, %v60, 0
    %81 = vmatprep.subr.bf16.mxu0 0
    %82 = vmatpush1.bf16.msra.mxu0 %v79
    %83 = vmatprep.subr.bf16.mxu0 0
    %84 = vmatpush1.bf16.msra.mxu0 0
    %85 = vmatprep.subr.bf16.mxu0 0
    %86 = vmatpush1.bf16.msra.mxu0 0
    %87 = vmatprep.subr.bf16.mxu0 0
    %88 = vmatpush1.bf16.msra.mxu0 0
    %89 = vmatprep.subr.bf16.mxu0 0
    %90 = vmatpush1.bf16.msra.mxu0 0
    %91 = vmatprep.subr.bf16.mxu0 0
    %92 = vmatpush1.bf16.msra.mxu0 0
    %93 = vmatprep.subr.bf16.mxu0 0
    %94 = vmatpush1.bf16.msra.mxu0 0
    %95 = vmatprep.subr.bf16.mxu0 0
    %96 = vmatpush1.bf16.msra.mxu0 0
    %97 = vmatprep.subr.bf16.mxu0 0
    %98 = vmatpush1.bf16.msra.mxu0 0
    %99 = vmatprep.subr.bf16.mxu0 0
    %100 = vmatpush1.bf16.msra.mxu0 0
    %101 = vmatprep.subr.bf16.mxu0 0
    %102 = vmatpush1.bf16.msra.mxu0 0
    %103 = vmatprep.subr.bf16.mxu0 0
    %104 = vmatpush1.bf16.msra.mxu0 0
    %105 = vmatprep.subr.bf16.mxu0 0
    %106 = vmatpush1.bf16.msra.mxu0 0
    %107 = vmatprep.subr.bf16.mxu0 0
    %108 = vmatpush1.bf16.msra.mxu0 0
    %109 = vmatprep.subr.bf16.mxu0 0
    %110 = vmatpush1.bf16.msra.mxu0 0
    %111 = vmatprep.subr.bf16.mxu0 0
    %112 = vmatpush1.bf16.msra.mxu0 0
    %113 = vmatprep.mubr.bf16.mxu0 0
    %114 = vmatmul.mubr.bf16.gmra.mrb[0].mxu0 %v75
    %v115 = vpop.f32.mrb[0].mxu0
    %v116 = vadd.f32 %v66, %v115
    %v117 = vpop.f32.mrb[0].mxu0
    %v118 = vpop.f32.mrb[0].mxu0
    %v119 = vadd.f32 %v66, %v118
    %v120 = vpop.f32.mrb[0].mxu0
    %121 = vdwg.mxu0
    %v122 = vmin.f32 %v116, 20.0
    %v123 = vmin.f32 %v119, 20.0
    %v124 = vmul.f32 %v122, 1.442695
    %v125 = vpow.pop %v124
    %v126 = vmul.f32 %v123, 1.442695
    %v127 = vpow.pop %v126
    %v128 = vadd.f32 %v125, 1.0
    %v129 = vadd.f32 %v127, 1.0
    %v130 = vmul.f32 %v128, %v128
    %v131 = vmul.f32 %v129, %v129
    %v132 = vsub.f32 %v130, 1.0
    %v133 = vsub.f32 %v131, 1.0
    %v134 = vmul.f32 %v116, %v132
    %v135 = vmul.f32 %v119, %v133
    %v136 = vadd.f32 %v130, 1.0
    %v137 = vadd.f32 %v131, 1.0
    %v138 = vrcp.pop %v136
    %v139 = vrcp.pop %v137
    %v140 = vmul.f32 %v134, %v138
    %v141 = vmul.f32 %v135, %v139
    %v142 = vpack.c.bf16 %v141, %v140
    %v143 = vld [vmem:[#allocation3] sm:$0xf]
    %v144 = vld [vmem:[#allocation3 + $0x4] sm:$0xf]
    %v145 = vld [vmem:[#allocation3 + $0x8] sm:$0xf]
    %v146 = vld [vmem:[#allocation3 + $0xc] sm:$0xf]
    %v147 = vld [vmem:[#allocation3 + $0x10] sm:$0xf]
    %v148 = vld [vmem:[#allocation3 + $0x14] sm:$0xf]
    %v149 = vld [vmem:[#allocation3 + $0x18] sm:$0xf]
    %v150 = vld [vmem:[#allocation3 + $0x1c] sm:$0xf]
    %v151 = vld [vmem:[#allocation3 + $0x20] sm:$0xf]
    %v152 = vld [vmem:[#allocation3 + $0x24] sm:$0xf]
    %v153 = vld [vmem:[#allocation3 + $0x28] sm:$0xf]
    %v154 = vld [vmem:[#allocation3 + $0x2c] sm:$0xf]
    %v155 = vld [vmem:[#allocation3 + $0x30] sm:$0xf]
    %v156 = vld [vmem:[#allocation3 + $0x34] sm:$0xf]
    %v157 = vld [vmem:[#allocation3 + $0x38] sm:$0xf]
    %v158 = vld [vmem:[#allocation3 + $0x3c] sm:$0xf]
    %v159 = vld [vmem:[%s4] sm:$0x1]
    %v161 = vlaneseq
    %v162 = vshrl.u32 %v161, 7
    %v163 = vsub.s32 0, %v162
    %v164 = vrot.slane %v159, %v163
    %v182 = vunpack.c.l.b16 %v143
    %v183 = vunpack.c.l.b16 %v144
    %v184 = vunpack.c.l.b16 %v145
    %v185 = vunpack.c.l.b16 %v146
    %v186 = vunpack.c.l.b16 %v147
    %v187 = vunpack.c.l.b16 %v148
    %v188 = vunpack.c.l.b16 %v149
    %v189 = vunpack.c.l.b16 %v150
    %v190 = vunpack.c.l.b16 %v151
    %v191 = vunpack.c.l.b16 %v152
    %v192 = vunpack.c.l.b16 %v153
    %v193 = vunpack.c.l.b16 %v154
    %v194 = vunpack.c.l.b16 %v155
    %v195 = vunpack.c.l.b16 %v156
    %v196 = vunpack.c.l.b16 %v157
    %v197 = vunpack.c.l.b16 %v158
    %v198 = vpack.c.b16 %v183, %v182
    %v199 = vpack.c.b16 %v185, %v184
    %v200 = vpack.c.b16 %v187, %v186
    %v201 = vpack.c.b16 %v189, %v188
    %v202 = vpack.c.b16 %v191, %v190
    %v203 = vpack.c.b16 %v193, %v192
    %v204 = vpack.c.b16 %v195, %v194
    %v205 = vpack.c.b16 %v197, %v196
    %214 = vmatprep.subr.bf16.mxu0 0
    %215 = vmatpush1.bf16.msra.mxu0 %v198
    %216 = vmatprep.subr.bf16.mxu0 0
    %217 = vmatpush1.bf16.msra.mxu0 %v199
    %218 = vmatprep.subr.bf16.mxu0 0
    %219 = vmatpush1.bf16.msra.mxu0 %v200
    %220 = vmatprep.subr.bf16.mxu0 0
    %221 = vmatpush1.bf16.msra.mxu0 %v201
    %222 = vmatprep.subr.bf16.mxu0 0
    %223 = vmatpush1.bf16.msra.mxu0 %v202
    %224 = vmatprep.subr.bf16.mxu0 0
    %225 = vmatpush1.bf16.msra.mxu0 %v203
    %226 = vmatprep.subr.bf16.mxu0 0
    %227 = vmatpush1.bf16.msra.mxu0 %v204
    %228 = vmatprep.subr.bf16.mxu0 0
    %229 = vmatpush1.bf16.msra.mxu0 %v205
    %230 = vmatprep.subr.bf16.mxu0 0
    %231 = vmatpush1.bf16.msra.mxu0 0
    %232 = vmatprep.subr.bf16.mxu0 0
    %233 = vmatpush1.bf16.msra.mxu0 0
    %234 = vmatprep.subr.bf16.mxu0 0
    %235 = vmatpush1.bf16.msra.mxu0 0
    %236 = vmatprep.subr.bf16.mxu0 0
    %237 = vmatpush1.bf16.msra.mxu0 0
    %238 = vmatprep.subr.bf16.mxu0 0
    %239 = vmatpush1.bf16.msra.mxu0 0
    %240 = vmatprep.subr.bf16.mxu0 0
    %241 = vmatpush1.bf16.msra.mxu0 0
    %242 = vmatprep.subr.bf16.mxu0 0
    %243 = vmatpush1.bf16.msra.mxu0 0
    %244 = vmatprep.subr.bf16.mxu0 0
    %245 = vmatpush1.bf16.msra.mxu0 0
    %246 = vmatprep.mubr.bf16.mxu0 0
    %247 = vmatmul.mubr.bf16.gmra.mrb[0].mxu0 %v142
    %v248 = vpop.f32.mrb[0].mxu0
    %v249 = vadd.f32 %v164, %v248
    %v250 = vpop.f32.mrb[0].mxu0
    %v251 = vpop.f32.mrb[0].mxu0
    %v252 = vadd.f32 %v164, %v251
    %v253 = vpop.f32.mrb[0].mxu0
    %254 = vdwg.mxu0
    %v255 = vmin.f32 %v249, 20.0
    %v256 = vmin.f32 %v252, 20.0
    %v257 = vmul.f32 %v255, 1.442695
    %v258 = vpow.pop %v257
    %v259 = vmul.f32 %v256, 1.442695
    %v260 = vpow.pop %v259
    %v261 = vadd.f32 %v258, 1.0
    %v262 = vadd.f32 %v260, 1.0
    %v263 = vmul.f32 %v261, %v261
    %v264 = vmul.f32 %v262, %v262
    %v265 = vsub.f32 %v263, 1.0
    %v266 = vsub.f32 %v264, 1.0
    %v267 = vmul.f32 %v249, %v265
    %v268 = vmul.f32 %v252, %v266
    %v269 = vadd.f32 %v263, 1.0
    %v270 = vadd.f32 %v264, 1.0
    %v271 = vrcp.pop %v269
    %v272 = vrcp.pop %v270
    %v273 = vmul.f32 %v267, %v271
    %v274 = vmul.f32 %v268, %v272
    %v275 = vld [vmem:[#allocation2] sm:$0x3]
    %v276 = vrot.slane %v273, 4
    %v277 = vadd.f32 %v273, %v276
    %v278 = vrot.slane %v277, 2
    %v279 = vadd.f32 %v277, %v278
    %v280 = vrot.slane %v279, 1
    %v281 = vadd.f32 %v279, %v280
    %v282 = vrot.slane %v274, 4
    %v283 = vadd.f32 %v274, %v282
    %v284 = vrot.slane %v283, 2
    %v285 = vadd.f32 %v283, %v284
    %v286 = vrot.slane %v285, 1
    %v287 = vadd.f32 %v285, %v286
    %vm290 = vcmask 1041409
    %v291 = vsel %vm290, %v287, %v281
    %v293 = vadd.f32 %v275, %v291
    %294 = vst [vmem:[#allocation2] sm:$0x3] %v293
    // Predicated region
    $region30: #{tpu_custom_call.1} parent=1 // pred_check
      %p295 = pneg %p53
    $region31: #{tpu_custom_call.1} parent=1 // pred_check_branch
      %297 = sbr.rel (%p295) target = $region33
    $region32: #{tpu_custom_call.1} parent=1 // pred_region
      %v298 = vld [vmem:[#allocation2] sm:$0x3]
      %299 = vst [vmem:[#allocation6] sm:$0x3] %v298
    $region33: #{tpu_custom_call.1} parent=1 // pred_fallthru
      _
    // Predicated region
    $region34: #{tpu_custom_call.1} parent=1 // pred_check
      _
    $region35: #{tpu_custom_call.1} parent=1 // pred_check_branch
      %301 = sbr.rel (0) target = $region37
    $region36: #{tpu_custom_call.1} parent=1 // pred_region
      %s303 = ssub.s32 32, 32
      %304 = vsyncadd [#allocation5], %s303
      %s306 = sshll.u32 [#allocation6], 4
      %s307 = int_to_ptr.vmem [resolvable:$true] %s306
      %309 = dma.vmem_to_hbm [thread:$0]  %s307, 32, %s5, [#allocation5]
    $region37: #{tpu_custom_call.1} parent=1 // pred_fallthru
      _
    // Predicated region
    $region38: #{tpu_custom_call.1} parent=1 // pred_check
      _
    $region39: #{tpu_custom_call.1} parent=1 // pred_check_branch
      %311 = sbr.rel (0) target = $region41
    $region40: #{tpu_custom_call.1} parent=1 // pred_region
      %312 = dma.done [#allocation5], 32
    $region41: #{tpu_custom_call.1} parent=1 // pred_fallthru
      _
    %313 = vsyncpa [#allocation4], 1
    %314 = vsyncpa [#allocation5], 1

</llo_original>
